<compile_context>
chip_gen: v7x
topology: tpu7x:2x2x1
jax: 0.10.0
libtpu: 0.0.40
codegen_flags: <defaults>
</compile_context>

<pallas_src>
import math

import jax
import jax.numpy as jnp
from jax.experimental import pallas as pl
from jax.experimental.pallas import tpu as pltpu


# --------------------------------------------------------------------------- #
# Helpers
# --------------------------------------------------------------------------- #
def _inverse_permutation(dims):
    n = len(dims)
    if sorted(dims) != list(range(n)):
        raise ValueError(f"dims={dims!r} is not a permutation of range({n})")
    inv = [0] * n
    for out_axis, in_axis in enumerate(dims):
        inv[in_axis] = out_axis
    return inv


def _sublane_granularity(itemsize):
    # Min second-minor tile rows: 8 for 32-bit, 16 for 16-bit, 32 for 8-bit.
    return max(8, 32 // max(1, itemsize))


def _granularity(out_axis, dims, n, itemsize):
    """Tile granularity for an output axis so that BOTH the output block and
    the corresponding input block satisfy the TPU min-tile constraint."""
    sub = _sublane_granularity(itemsize)
    g_out = 128 if out_axis == n - 1 else (sub if out_axis == n - 2 else 1)
    in_axis = dims[out_axis]
    g_in = 128 if in_axis == n - 1 else (sub if in_axis == n - 2 else 1)
    return max(g_out, g_in)  # all values divide 128 -> max == lcm


def _vmem_budget():
    """Per-generation block budget + scoped VMEM limit (review #5/#7)."""
    try:
        vmem = int(pltpu.get_tpu_info().vmem_capacity_bytes)
    except Exception:
        vmem = 64 * 1024 * 1024  # conservative fallback: v7x per-core VMEM
    block_budget = vmem // 16    # residency ~ 4x block (dbl-buffered in + out)
    vmem_limit = vmem // 2       # raise v5e's 16 MiB scoped default, safe on v7x
    return block_budget, vmem_limit


def _largest_divisor_leq(x, limit):
    limit = min(x, limit, 1 << 16)
    for d in range(limit, 0, -1):
        if x % d == 0:
            return d
    return 1


def _fold_trailing_fixed(shape, dims):
    """If a trailing run of >= 2 axes are fixed points of the permutation,
    regroup that contiguous trailing region (wrapper reshape, free) into
    (rows, lanes) with lanes a multiple of 128 -> lane-dense unmasked stores,
    leading permutation handled purely by DMA steering, identity kernel body.
    Returns (folded_shape, folded_dims) or None."""
    n = len(dims)
    t = n
    while t > 0 and dims[t - 1] == t - 1:
        t -= 1
    if n - t < 2:
        return None
    total = math.prod(shape[t:])
    if total % 128 != 0 or total == 0:
        return None
    m = total // 128
    divs = set()
    i = 1
    while i * i <= m:
        if m % i == 0:
            divs.add(i)
            divs.add(m // i)
        i += 1
    lane_opts = sorted(128 * k for k in divs)
    good = [L for L in lane_opts if total // L >= 8]   # prefer dense sublanes
    lanes = max(good) if good else min(lane_opts)
    rows = total // lanes
    folded_shape = tuple(shape[:t]) + (rows, lanes)
    folded_dims = tuple(dims[:t]) + (t, t + 1)
    return folded_shape, folded_dims


def _choose_out_block(out_shape, dims, itemsize, budget):
    """Critical output axes (output's last two + wherever the input's last two
    land) get full extent (shrunk at dtype-aware granularity if oversized);
    non-critical leading axes are then GROWN to fill the budget, but only if
    their input/output relative order is preserved (body stays a copy)."""
    n = len(dims)
    inv = _inverse_permutation(dims)
    critical = sorted({n - 2, n - 1, inv[n - 2], inv[n - 1]})
    block = [1] * n
    for k in critical:
        block[k] = out_shape[k]

    def nbytes(b):
        return math.prod(b) * itemsize

    # -- shrink an oversized critical slab (keep the output lane axis dense
    #    for as long as possible: unmasked vst beats masked partial stores) --
    shrink_order = sorted(critical, key=lambda k: (k == n - 1, -out_shape[k]))
    progress = True
    while nbytes(block) > budget and progress:
        progress = False
        for k in shrink_order:
            g = _granularity(k, dims, n, itemsize)
            half = block[k] // 2
            if (block[k] % 2 == 0 and half >= g and half % g == 0
                    and out_shape[k] % half == 0):
                block[k] = half
                progress = True
                if nbytes(block) <= budget:
                    break

    # -- grow non-critical (leading) axes to fill the budget (review #1) --
    for k in sorted((a for a in range(n) if a not in critical), reverse=True):
        if out_shape[k] == 1:
            continue
        cur = nbytes(block)
        max_mult = budget // max(cur, 1)
        if max_mult < 2:
            break
        others = [j for j in range(n)
                  if j != k and (block[j] > 1 or j in critical)]
        if not all((k < j) == (dims[k] < dims[j]) for j in others):
            continue  # growing would force an in-kernel leading-axis transpose
        block[k] = _largest_divisor_leq(out_shape[k], max_mult)

    return tuple(block)


def _maybe_split_for_megacore(block, out_shape, dims, itemsize):
    """If everything fits one block, split one axis in two so the grid has
    >= 2 'parallel' steps and both v7x TensorCores get work (review #6)."""
    n = len(dims)
    if any(block[k] < out_shape[k] for k in range(n)):
        return block
    inv = _inverse_permutation(dims)
    critical = {n - 2, n - 1, inv[n - 2], inv[n - 1]}
    order = sorted(range(n),
                   key=lambda k: (k in critical, k == n - 1, -out_shape[k]))
    for k in order:
        g = _granularity(k, dims, n, itemsize)
        half = block[k] // 2
        if block[k] % 2 == 0 and half >= g and half % g == 0:
            new = list(block)
            new[k] = half
            return tuple(new)
    return block


def _make_permute_kernel(kept_in, inv):
    out_order = sorted(kept_in, key=lambda m: inv[m])
    perm = tuple(kept_in.index(m) for m in out_order)
    if perm == tuple(range(len(perm))):
        def kernel(x_ref, o_ref):
            # Axis re-ordering is done entirely by DMA block steering.
            o_ref[...] = x_ref[...]
    else:
        def kernel(x_ref, o_ref):
            # Minor (sublane/lane) axes move: in-register XLU transpose,
            # hidden under the HBM DMAs (kernel stays HBM-bound).
            o_ref[...] = jnp.transpose(x_ref[...], perm)
    return kernel


# --------------------------------------------------------------------------- #
# Pallas permute
# --------------------------------------------------------------------------- #
def _permute_pallas(x, dims):
    n = x.ndim
    inv = _inverse_permutation(dims)
    out_shape = tuple(x.shape[d] for d in dims)
    itemsize = x.dtype.itemsize

    budget, vmem_limit = _vmem_budget()
    out_block = _choose_out_block(out_shape, dims, itemsize, budget)
    out_block = _maybe_split_for_megacore(out_block, out_shape, dims, itemsize)
    in_block = tuple(out_block[inv[m]] for m in range(n))

    critical = {n - 2, n - 1, inv[n - 2], inv[n - 1]}
    keep_out = [out_block[k] != 1 or k in critical for k in range(n)]
    keep_in = [keep_out[inv[m]] for m in range(n)]
    kept_in = [m for m in range(n) if keep_in[m]]

    grid_axes = [k for k in range(n) if out_block[k] < out_shape[k]]
    axis_pos = {k: i for i, k in enumerate(grid_axes)}
    grid = tuple(pl.cdiv(out_shape[k], out_block[k]) for k in grid_axes) or (1,)

    def out_index_map(*g):
        return tuple(g[axis_pos[k]] if k in axis_pos else 0 for k in range(n))

    def in_index_map(*g):
        # Steer the input DMA through the inverse permutation: the block index
        # along input axis m is the block index of output axis inv[m].
        return tuple(g[axis_pos[inv[m]]] if inv[m] in axis_pos else 0
                     for m in range(n))

    # Size-1 non-critical dims are squeezed (None) so the kernel refs need no
    # in-kernel reshape (review #3).
    in_spec_shape = tuple(in_block[m] if keep_in[m] else None for m in range(n))
    out_spec_shape = tuple(out_block[k] if keep_out[k] else None for k in range(n))

    kernel = _make_permute_kernel(kept_in, inv)
    bytes_accessed = 2 * math.prod(x.shape) * itemsize

    return pl.pallas_call(
        kernel,
        out_shape=jax.ShapeDtypeStruct(out_shape, x.dtype),
        grid=grid,
        in_specs=[pl.BlockSpec(in_spec_shape, in_index_map)],
        out_specs=pl.BlockSpec(out_spec_shape, out_index_map),
        compiler_params=pltpu.CompilerParams(
            dimension_semantics=("parallel",) * len(grid),
            vmem_limit_bytes=vmem_limit),
        cost_estimate=pl.CostEstimate(
            flops=0, transcendentals=0, bytes_accessed=bytes_accessed),
    )(x)


def permute(x: jax.Array, dims) -> jax.Array:
    """Pallas TPU equivalent of torch.Tensor.permute(*dims)."""
    n = x.ndim
    dims = tuple(int(d) if int(d) >= 0 else int(d) + n for d in dims)
    if len(dims) != n:
        raise ValueError(f"len(dims)={len(dims)} does not match x.ndim={n}")
    _inverse_permutation(dims)  # validate
    if n < 2 or dims == tuple(range(n)):
        return x  # identity permutation is a no-op

    out_shape = tuple(x.shape[d] for d in dims)

    # Lane-dense fold of the trailing fixed axes (review #2) — pure layout
    # plumbing on the wrapper side; the kernel body stays an identity copy.
    folded = _fold_trailing_fixed(x.shape, dims)
    if folded is not None:
        f_shape, f_dims = folded
        y = _permute_pallas(x.reshape(f_shape), f_dims)
        return y.reshape(out_shape)
    return _permute_pallas(x, dims)


class Permute:
    """Mirror of the PyTorch module: Permute(dims)(x) == x.permute(*dims)."""

    def __init__(self, dims) -> None:
        self.dims = tuple(dims)

    def __call__(self, x: jax.Array) -> jax.Array:
        return permute(x, self.dims)


# --------------------------------------------------------------------------- #
# Demo / self-test
# --------------------------------------------------------------------------- #
if __name__ == "__main__":
    key = jax.random.PRNGKey(0)
    k1, k2 = jax.random.split(key)

    # Case 1: leading-axis permutation (N, C swap on NCHW).  Trailing fixed
    # axes are folded to a lane-dense (rows, 128) layout; the swap itself is
    # pure DMA block steering, kernel body is an identity copy.
    x1 = jax.random.normal(k1, (2, 4, 16, 16), dtype=jnp.float32)
    dims1 = (1, 0, 2, 3)
    y1 = jax.block_until_ready(Permute(dims1)(x1))
    ref1 = jnp.transpose(x1, dims1)
    assert y1.shape == ref1.shape, (y1.shape, ref1.shape)
    assert y1.dtype == ref1.dtype, (y1.dtype, ref1.dtype)
    assert jnp.array_equal(y1, ref1), "mismatch vs reference for dims=(1,0,2,3)"

    # Case 2: permutation moving the minor (sublane/lane) axes -> batched
    # in-register (XLU) transpose of the block.
    x2 = jax.random.normal(k2, (2, 4, 16, 128), dtype=jnp.float32)
    dims2 = (0, 1, 3, 2)
    y2 = jax.block_until_ready(Permute(dims2)(x2))
    ref2 = jnp.transpose(x2, dims2)
    assert y2.shape == ref2.shape, (y2.shape, ref2.shape)
    assert jnp.array_equal(y2, ref2), "mismatch vs reference for dims=(0,1,3,2)"

    print("KERNEL_OK")
</pallas_src>

<mosaic_0001>
module attributes {stable_mosaic.version = 11 : i64} {
  func.func @kernel(%arg0: i32, %arg1: memref<2x1x2x128xf32, #tpu.memory_space<vmem>>, %arg2: memref<1x2x2x128xf32, #tpu.memory_space<vmem>>) attributes {dimension_semantics = [#tpu.dimension_semantics<parallel>], iteration_bounds = array<i64: 4>, scalar_prefetch = 0 : i64, scratch_operands = 0 : i64, tpu.core_type = #tpu.core_type<tc>, window_params = [{transform_indices = @transform_0, window_bounds = array<i64: 2, 1, 2, 128>}, {transform_indices = @transform_1, window_bounds = array<i64: 1, 2, 2, 128>}]} {
    %c0 = arith.constant 0 : index
    %c0_0 = arith.constant 0 : index
    %c0_1 = arith.constant 0 : index
    %c0_2 = arith.constant 0 : index
    %0 = vector.load %arg1[%c0, %c0_0, %c0_1, %c0_2] : memref<2x1x2x128xf32, #tpu.memory_space<vmem>>, vector<2x1x2x128xf32>
    %1 = vector.shape_cast %0 : vector<2x1x2x128xf32> to vector<2x2x128xf32>
    %c0_3 = arith.constant 0 : index
    %c0_4 = arith.constant 0 : index
    %c0_5 = arith.constant 0 : index
    %c0_6 = arith.constant 0 : index
    %2 = vector.load %arg2[%c0_3, %c0_4, %c0_5, %c0_6] : memref<1x2x2x128xf32, #tpu.memory_space<vmem>>, vector<1x2x2x128xf32>
    %3 = vector.shape_cast %2 : vector<1x2x2x128xf32> to vector<2x2x128xf32>
    %4 = vector.shape_cast %1 : vector<2x2x128xf32> to vector<1x2x2x128xf32>
    tpu.vector_store %arg2[%c0_3, %c0_4, %c0_5, %c0_6], %4 {strides = array<i32>} : memref<1x2x2x128xf32, #tpu.memory_space<vmem>>, vector<1x2x2x128xf32>,
    return
  }
  func.func @transform_0(%arg0: i32) -> (i32, i32, i32, i32) {
    %c0_i32 = arith.constant 0 : i32
    %c0_i32_0 = arith.constant 0 : i32
    %c0_i32_1 = arith.constant 0 : i32
    %c0_i32_2 = arith.constant 0 : i32
    return %c0_i32, %arg0, %c0_i32_0, %c0_i32_1 : i32, i32, i32, i32
  }
  func.func @transform_1(%arg0: i32) -> (i32, i32, i32, i32) {
    %c0_i32 = arith.constant 0 : i32
    %c0_i32_0 = arith.constant 0 : i32
    %c0_i32_1 = arith.constant 0 : i32
    %c0_i32_2 = arith.constant 0 : i32
    return %arg0, %c0_i32, %c0_i32_0, %c0_i32_1 : i32, i32, i32, i32
  }
}

</mosaic_0001>

<llo_original>
// kernel: tpu_custom_call.1
$region0: #{tpu_custom_call.1}
  #allocation0 [shape = 'u32[]', space=smem, size = 0x4, offset = 0x4, fixed_abs, tag = 'smem constant byte address 0x4 - core index']
  #allocation1 [shape = 'u32[144,128]{1,0:T(1,128)}', space=vmem, size = 0x12000, scoped, tag = 'internal scratch']
  %s0 = inlined_call_operand.hbm [shape: f32[2,4,2,128], index: 0, kind: input, shape index: {}]
  %s1 = inlined_call_operand.hbm [shape: f32[4,2,2,128], index: 1, kind: output, shape index: {}]
  %s2 = sld [smem:[#allocation0]]
  $region41: #{tpu_custom_call.1} parent=0
    _
  %s4 = ssub.s32 1, %s2
  %s5 = scalar_select 0, %s4, %s2
  $region1: #{tpu_custom_call.1} parent=0
    #allocation2 [shape = 'u8[4096]{0}', space=vmem, size = 0x1000, scoped, tag = 'input window, operand 0']
    #allocation3 [shape = 's32[2]{0}', space=sflag, size = 0x8, scoped, tag = 'scoped memory for tpu_custom_call.1']
    #allocation4 [shape = 's32[2]{0}', space=sflag, size = 0x8, scoped, tag = 'scoped memory for tpu_custom_call.1']
    #allocation5 [shape = 'u8[4096]{0}', space=vmem, size = 0x1000, scoped, tag = 'output window, operand 0']
    %6 = vsyncpa [#allocation3], 0
    %s7 = scalar_lea.sflag [#allocation3], 1
    %8 = vsyncpa %s7, 0
    %9 = vsyncpa [#allocation4], 0
    %s10 = scalar_lea.sflag [#allocation4], 1
    %11 = vsyncpa %s10, 0
    loop: start=0, step=1, limit=6
    $region2: #{tpu_custom_call.1} parent=1 // loop_pre_header
      _
    $region3: #{tpu_custom_call.1} parent=1 // loop_header
      %s13 = sphi 0, %s17
      %p14 = scmp.ge.s32.totalorder %s13, 6
      %s23 = sphi 0, %s25
      %s26 = sphi 0, %s23
      %s27 = sphi 0, %s26
      %s43 = sphi 0, %s27
      %s49 = sphi 0, %s51
      %s52 = sphi 0, %s49
      %s53 = sphi 0, %s52
      %s69 = sphi 0, %s53
    $region4: #{tpu_custom_call.1} parent=1 // loop_header_branch
      %16 = sbr.rel (%p14) target = $region8
    $region5: #{tpu_custom_call.1} parent=1 // loop_body
      %s18 = ssub.s32 %s13, 1
      %s19 = ssub.s32 %s13, 2
      %s20 = sadd.s32 %s13, 1
      %s21 = ssub.s32 %s13, %s20
      %p22 = scmp.eq.s32.totalorder %s21, 0
      %s24 = sadd.s32 %s23, 1
      %s25 = scalar_select %p22, %s23, %s24
      %p28 = pneg %p22
      %p29 = scmp.eq.s32.totalorder %s13, 3
      %p30 = por %p28, %p29
      %p31 = scmp.ne.s32.totalorder %s23, %s26
      %p32 = scmp.eq.s32.totalorder %s13, 0
      %p33 = por %p31, %p32
      %p34 = scmp.ne.s32.totalorder %s23, %s26
      %p35 = scmp.eq.s32.totalorder %s18, 3
      %p36 = por %p34, %p35
      %p37 = scmp.ne.s32.totalorder %s26, %s27
      %p38 = scmp.eq.s32.totalorder %s18, 0
      %p39 = por %p37, %p38
      %p40 = scmp.ne.s32.totalorder %s26, %s27
      %p41 = scmp.eq.s32.totalorder %s19, 3
      %p42 = por %p40, %p41
      %p44 = scmp.ne.s32.totalorder %s27, %s43
      %p45 = scmp.eq.s32.totalorder %s19, 0
      %p46 = por %p44, %p45
      %s47 = ssub.s32 %s13, %s20
      %p48 = scmp.eq.s32.totalorder %s47, 0
      %s50 = sadd.s32 %s49, 1
      %s51 = scalar_select %p48, %s49, %s50
      %p54 = pneg %p48
      %p55 = scmp.eq.s32.totalorder %s13, 3
      %p56 = por %p54, %p55
      %p57 = scmp.ne.s32.totalorder %s49, %s52
      %p58 = scmp.eq.s32.totalorder %s13, 0
      %p59 = por %p57, %p58
      %p60 = scmp.ne.s32.totalorder %s49, %s52
      %p61 = scmp.eq.s32.totalorder %s18, 3
      %p62 = por %p60, %p61
      %p63 = scmp.ne.s32.totalorder %s52, %s53
      %p64 = scmp.eq.s32.totalorder %s18, 0
      %p65 = por %p63, %p64
      %p66 = scmp.ne.s32.totalorder %s52, %s53
      %p67 = scmp.eq.s32.totalorder %s19, 3
      %p68 = por %p66, %p67
      %p70 = scmp.ne.s32.totalorder %s53, %s69
      %p71 = scmp.eq.s32.totalorder %s19, 0
      %p72 = por %p70, %p71
      %p73 = scmp.le.s32.totalorder 1, %s13
      %p74 = scmp.lt.s32.totalorder %s13, 5
      %p75 = pnand %p73, %p74
      %p76 = pneg %p75
      // Predicated region
      $region9: #{tpu_custom_call.1} parent=5 // pred_check
        _
      $region10: #{tpu_custom_call.1} parent=5 // pred_check_branch
        %78 = sbr.rel (%p75) target = $region12
      $region11: #{tpu_custom_call.1} parent=5 // pred_region
        %s79 = ssub.s32 %s13, 1
      $region12: #{tpu_custom_call.1} parent=5 // pred_fallthru
        _
      %p80 = scmp.lt.s32.totalorder %s13, 4
      // Predicated region
      $region13: #{tpu_custom_call.1} parent=5 // pred_check
        %p81 = pneg %p80
      $region14: #{tpu_custom_call.1} parent=5 // pred_check_branch
        %83 = sbr.rel (%p81) target = $region16
      $region15: #{tpu_custom_call.1} parent=5 // pred_region
        // Predicated region
        $region17: #{tpu_custom_call.1} parent=15 // pred_check
          %p84 = pneg %p33
        $region18: #{tpu_custom_call.1} parent=15 // pred_check_branch
          %86 = sbr.rel (%p84) target = $region20
        $region19: #{tpu_custom_call.1} parent=15 // pred_region
          %s87 = sand.u32 %s23, 1
          %s88 = scalar_lea.sflag [#allocation3], %s87
          %s89 = sand.u32 %s23, 1
          %s90 = smul.addr %s89, 4
          %s91 = scalar_lea.vmem [#allocation2], %s90
          %s93 = ssub.s32 64, 64
          %94 = vsyncadd %s88, %s93
          %s95 = smul.addr %s13, 32
          %s96 = scalar_lea.hbm %s0, %s95
          %s97 = sshll.u32 %s91, 4
          %s98 = int_to_ptr.vmem [resolvable:$true] %s97
          %103 = dma.hbm_to_vmem [thread:$0]  %s96, 64, %s98, %s88, 128, 32, 2
        $region20: #{tpu_custom_call.1} parent=15 // pred_fallthru
          _
      $region16: #{tpu_custom_call.1} parent=5 // pred_fallthru
        _
      %p104 = scmp.le.s32.totalorder 1, %s13
      %p105 = scmp.lt.s32.totalorder %s13, 5
      %p106 = pnand %p104, %p105
      %p107 = pneg %p106
      // Predicated region
      $region21: #{tpu_custom_call.1} parent=5 // pred_check
        _
      $region22: #{tpu_custom_call.1} parent=5 // pred_check_branch
        %109 = sbr.rel (%p106) target = $region24
      $region23: #{tpu_custom_call.1} parent=5 // pred_region
        %s110 = ssub.s32 %s13, 1
        %s111 = sand.u32 %s26, 1
        %s112 = scalar_lea.sflag [#allocation3], %s111
        %s113 = sand.u32 %s26, 1
        %s114 = smul.addr %s113, 4
        %s115 = scalar_lea.vmem [#allocation2], %s114
        // Predicated region
        $region25: #{tpu_custom_call.1} parent=23 // pred_check
          %p116 = pneg %p39
        $region26: #{tpu_custom_call.1} parent=23 // pred_check_branch
          %118 = sbr.rel (%p116) target = $region28
        $region27: #{tpu_custom_call.1} parent=23 // pred_region
          %119 = dma.done %s112, 64
        $region28: #{tpu_custom_call.1} parent=23 // pred_fallthru
          _
        %s120 = sand.u32 %s26, 1
        %s121 = scalar_lea.sflag [#allocation3], %s120
        %s122 = sand.u32 %s26, 1
        %s123 = smul.addr %s122, 4
        %s124 = scalar_lea.vmem [#allocation2], %s123
        %p125 = pneg %p39
        %p126 = pneg %p36
        %p127 = pneg %p65
        %p128 = pneg %p62
        %s129 = sand.u32 %s52, 1
        %s130 = scalar_lea.sflag [#allocation4], %s129
        %s131 = sand.u32 %s52, 1
        %s132 = smul.addr %s131, 4
        %s133 = scalar_lea.vmem [#allocation5], %s132
        %v134 = vld [vmem:[%s115] sm:$0x3]
        %v135 = vld [vmem:[%s115 + $0x2] sm:$0x3]
        %136 = vst [vmem:[%s133] sm:$0x3] %v134
        %137 = vst [vmem:[%s133 + $0x2] sm:$0x3] %v135
        %s138 = sand.u32 %s52, 1
        %s139 = scalar_lea.sflag [#allocation4], %s138
        %s140 = sand.u32 %s52, 1
        %s141 = smul.addr %s140, 4
        %s142 = scalar_lea.vmem [#allocation5], %s141
        // Predicated region
        $region29: #{tpu_custom_call.1} parent=23 // pred_check
          %p143 = pneg %p62
        $region30: #{tpu_custom_call.1} parent=23 // pred_check_branch
          %145 = sbr.rel (%p143) target = $region32
        $region31: #{tpu_custom_call.1} parent=23 // pred_region
          %s147 = ssub.s32 64, 64
          %148 = vsyncadd %s139, %s147
          %s149 = smul.addr %s18, 2
          %s150 = smul.addr %s149, 32
          %s151 = scalar_lea.hbm %s1, %s150
          %s152 = sshll.u32 %s142, 4
          %s153 = int_to_ptr.vmem [resolvable:$true] %s152
          %158 = dma.vmem_to_hbm [thread:$0]  %s153, 64, %s151, %s139, 32, 32, 2
        $region32: #{tpu_custom_call.1} parent=23 // pred_fallthru
          _
      $region24: #{tpu_custom_call.1} parent=5 // pred_fallthru
        _
      %p159 = scmp.le.s32.totalorder 2, %s13
      // Predicated region
      $region33: #{tpu_custom_call.1} parent=5 // pred_check
        %p160 = pneg %p159
      $region34: #{tpu_custom_call.1} parent=5 // pred_check_branch
        %162 = sbr.rel (%p160) target = $region36
      $region35: #{tpu_custom_call.1} parent=5 // pred_region
        %s163 = ssub.s32 %s13, 2
        // Predicated region
        $region37: #{tpu_custom_call.1} parent=35 // pred_check
          %p164 = pneg %p68
        $region38: #{tpu_custom_call.1} parent=35 // pred_check_branch
          %166 = sbr.rel (%p164) target = $region40
        $region39: #{tpu_custom_call.1} parent=35 // pred_region
          %s167 = sand.u32 %s53, 1
          %s168 = scalar_lea.sflag [#allocation4], %s167
          %s169 = sand.u32 %s53, 1
          %s170 = smul.addr %s169, 4
          %s171 = scalar_lea.vmem [#allocation5], %s170
          %172 = dma.done %s168, 64
        $region40: #{tpu_custom_call.1} parent=35 // pred_fallthru
          _
      $region36: #{tpu_custom_call.1} parent=5 // pred_fallthru
        _
    $region6: #{tpu_custom_call.1} parent=1 // loop_footer
      %s17 = sadd.s32 1, %s13
    $region7: #{tpu_custom_call.1} parent=1 // loop_footer_branch
      %12 = sbr.rel target = $region3
    $region8: #{tpu_custom_call.1} parent=1 // loop_exit
      _
    %173 = vsyncpa [#allocation3], 1
    %s174 = scalar_lea.sflag [#allocation3], 1
    %175 = vsyncpa %s174, 1
    %176 = vsyncpa [#allocation4], 1
    %s177 = scalar_lea.sflag [#allocation4], 1
    %178 = vsyncpa %s177, 1

</llo_original>
